<compile_context>
chip_gen: v7x
topology: tpu7x:2x2x1
jax: 0.10.0
libtpu: 0.0.40
codegen_flags: <defaults>
</compile_context>

<pallas_src>
import math
import functools

import jax
import jax.numpy as jnp
from jax.experimental import pallas as pl
from jax.experimental.pallas import tpu as pltpu


# ---------------------------------------------------------------------------
# Kernel 1: fused multi-scale conv (im2col matmul) + positional encoding
#           + multi-scale trend/seasonality decomposition + residual sum.
# ---------------------------------------------------------------------------
def _embed_decomp_kernel(xcol_ref, pe_ref, wconv_ref, bconv_ref,
                         wts_ref, bts_ref, o_ref):
    D = pe_ref.shape[-1]
    xc = xcol_ref[0]                                           # (rb, K) bf16
    feats = jnp.dot(xc, wconv_ref[...], preferred_element_type=jnp.float32)
    feats = feats + bconv_ref[...] + pe_ref[...]               # f32 residual path
    ts = jnp.dot(feats.astype(jnp.bfloat16), wts_ref[...],
                 preferred_element_type=jnp.float32)
    ts = ts + bts_ref[...]
    o_ref[0] = (feats + ts[:, :D] + ts[:, D:]).astype(o_ref.dtype)


def fused_embed_decomp(xcol, pe, wconv_t, bconv, wts, bts, *, time_block):
    B, T, K = xcol.shape
    D = pe.shape[-1]
    rb = time_block
    assert T % rb == 0 and (rb % 8 == 0 or rb == T)
    return pl.pallas_call(
        _embed_decomp_kernel,
        out_shape=jax.ShapeDtypeStruct((B, T, D), jnp.float32),
        grid_spec=pltpu.PrefetchScalarGridSpec(
            num_scalar_prefetch=0,
            grid=(B, T // rb),
            in_specs=[
                pl.BlockSpec((1, rb, K), lambda b, i: (b, i, 0)),   # im2col rows (bf16)
                pl.BlockSpec((rb, D), lambda b, i: (i, 0)),         # PE rows (not B-tiled)
                pl.BlockSpec((K, D), lambda b, i: (0, 0)),          # fused conv weight (in,out)
                pl.BlockSpec((1, D), lambda b, i: (0, 0)),          # fused conv bias
                pl.BlockSpec((D, 2 * D), lambda b, i: (0, 0)),      # [trend|seas] weight
                pl.BlockSpec((1, 2 * D), lambda b, i: (0, 0)),      # [trend|seas] bias
            ],
            out_specs=pl.BlockSpec((1, rb, D), lambda b, i: (b, i, 0)),
        ),
        compiler_params=pltpu.CompilerParams(
            dimension_semantics=("parallel", "parallel")),
    )(xcol, pe, wconv_t, bconv, wts, bts)


# ---------------------------------------------------------------------------
# Kernel 2: fused block-sparse attention stack (all layers) + fc_out head.
#   grid = (B, num_blocks); activation for one seq block stays in VMEM across
#   every layer; the head runs only in the block that owns the last timestep.
# ---------------------------------------------------------------------------
def _attn_stack_head_kernel(x_ref, wqkv_ref, bqkv_ref, wo_ref, bo_ref,
                            ln_g_ref, ln_b_ref, w_out_ref, b_out_ref, y_ref,
                            *, num_heads, num_layers, num_blocks, block_size,
                            seq_len, last_local):
    blk = pl.program_id(1)
    L = x_ref.shape[1]
    D = x_ref.shape[2]
    hd = D // num_heads
    scale = 1.0 / math.sqrt(hd)

    # Additive key mask for zero-padded tail positions (T padded to num_blocks*block_size).
    key_pos = blk * block_size + jax.lax.broadcasted_iota(jnp.int32, (1, L), 1)
    kmask = jnp.where(key_pos < seq_len, 0.0, -1e30).astype(jnp.float32)   # (1, L)

    h = x_ref[0].astype(jnp.float32)          # (L, D), VMEM-resident across layers
    for l in range(num_layers):               # static unroll; num_layers is tiny
        wqkv_l = wqkv_ref[l]                  # (D, 3D) bf16, pre-transposed
        bqkv_l = bqkv_ref[l]                  # (1, 3D) f32
        wo_l = wo_ref[l]                      # (D, D)  bf16, pre-transposed
        bo_l = bo_ref[l]                      # (1, D)  f32

        qkv = jnp.dot(h.astype(jnp.bfloat16), wqkv_l,
                      preferred_element_type=jnp.float32) + bqkv_l

        out = jnp.zeros((L, D), jnp.float32)
        for hh in range(num_heads):           # static unroll; no head concat
            q = qkv[:, hh * hd:(hh + 1) * hd]
            k = qkv[:, D + hh * hd:D + (hh + 1) * hd]
            v = qkv[:, 2 * D + hh * hd:2 * D + (hh + 1) * hd]
            s = jax.lax.dot_general(q.astype(jnp.bfloat16), k.astype(jnp.bfloat16),
                                    (((1,), (1,)), ((), ())),
                                    preferred_element_type=jnp.float32) * scale
            s = s + kmask                      # mask padded keys
            s = s - jnp.max(s, axis=-1, keepdims=True)
            p = jnp.exp(s)                     # softmax kept in f32
            p = p * pl.reciprocal(jnp.sum(p, axis=-1, keepdims=True), approx=True)
            ctx = jnp.dot(p.astype(jnp.bfloat16), v.astype(jnp.bfloat16),
                          preferred_element_type=jnp.float32)           # (L, hd)
            # accumulate directly through the matching W_o row slice (no concat)
            out = out + jnp.dot(ctx.astype(jnp.bfloat16),
                                wo_l[hh * hd:(hh + 1) * hd, :],
                                preferred_element_type=jnp.float32)
        h = out + bo_l

    # fc_out head (LayerNorm -> Dropout(identity) -> Linear), only where the
    # last real timestep lives.
    @pl.when(blk == num_blocks - 1)
    def _():
        hl = h[last_local:last_local + 1, :]                    # (1, D)
        mu = jnp.mean(hl, axis=-1, keepdims=True)
        var = jnp.mean((hl - mu) ** 2, axis=-1, keepdims=True)
        hn = (hl - mu) * jax.lax.rsqrt(var + 1e-5)
        yv = hn * ln_g_ref[...] + ln_b_ref[...]
        y_ref[0] = (jnp.dot(yv, w_out_ref[...], preferred_element_type=jnp.float32)
                    + b_out_ref[...]).astype(y_ref.dtype)


def fused_block_attention_head(h_blocks, wqkv, bqkv, wo, bo, ln_g, ln_b,
                               w_out, b_out, *, batch, num_blocks, block_size,
                               seq_len, num_heads):
    NL, D, _ = wqkv.shape
    O = w_out.shape[1]
    nb = num_blocks
    last_local = (seq_len - 1) - (nb - 1) * block_size
    kernel = functools.partial(
        _attn_stack_head_kernel, num_heads=num_heads, num_layers=NL,
        num_blocks=nb, block_size=block_size, seq_len=seq_len,
        last_local=last_local)
    # TODO(synk): for large T, coarsen the grid so each step handles G seq blocks
    # (shared (G*block_size, D) QKV projection) to raise MXU sublane occupancy.
    return pl.pallas_call(
        kernel,
        out_shape=jax.ShapeDtypeStruct((batch, 1, O), jnp.float32),
        grid_spec=pltpu.PrefetchScalarGridSpec(
            num_scalar_prefetch=0,
            grid=(batch, nb),
            in_specs=[
                pl.BlockSpec((1, block_size, D), lambda b, k: (b * nb + k, 0, 0)),
                pl.BlockSpec((NL, D, 3 * D), lambda b, k: (0, 0, 0)),
                pl.BlockSpec((NL, 1, 3 * D), lambda b, k: (0, 0, 0)),
                pl.BlockSpec((NL, D, D), lambda b, k: (0, 0, 0)),
                pl.BlockSpec((NL, 1, D), lambda b, k: (0, 0, 0)),
                pl.BlockSpec((1, D), lambda b, k: (0, 0)),
                pl.BlockSpec((1, D), lambda b, k: (0, 0)),
                pl.BlockSpec((D, O), lambda b, k: (0, 0)),
                pl.BlockSpec((1, O), lambda b, k: (0, 0)),
            ],
            out_specs=pl.BlockSpec((1, 1, O), lambda b, k: (b, 0, 0)),
        ),
        compiler_params=pltpu.CompilerParams(
            dimension_semantics=("parallel", "arbitrary")),
    )(h_blocks, wqkv, bqkv, wo, bo, ln_g, ln_b, w_out, b_out)


# ---------------------------------------------------------------------------
# Full model forward (wrapper-side work is one-time layout/parameter plumbing).
# ---------------------------------------------------------------------------
def _positional_encoding(T, D):
    position = jnp.arange(T, dtype=jnp.float32)[:, None]
    div_term = jnp.exp(jnp.arange(0, D, 2, dtype=jnp.float32)
                       * (-math.log(10000.0) / D))
    pe = jnp.zeros((T, D), jnp.float32)
    pe = pe.at[:, 0::2].set(jnp.sin(position * div_term))
    pe = pe.at[:, 1::2].set(jnp.cos(position * div_term))
    return pe


def _pick_time_block(T, target):
    if T <= target:
        return T
    for cand in range(min(target, T), 7, -1):
        if T % cand == 0 and cand % 8 == 0:
            return cand
    return T


def advanced_auto_informer_forward(x, params, *, num_heads, block_size,
                                   row_block=1024):
    B, T, Cin = x.shape
    D = params["conv_w"][0].shape[0]
    scales = params["scales"]
    assert D % num_heads == 0
    assert all(k % 2 == 1 for k in scales), \
        "center-aligned conv fold requires odd kernel widths"

    # --- fold the multi-scale convs into one "same"-padded width-kmax conv ---
    kmax = max(scales)
    wc = jnp.zeros((D, Cin, kmax), jnp.float32)
    bc = jnp.zeros((D,), jnp.float32)
    for w, b, k in zip(params["conv_w"], params["conv_b"], scales):
        off = (kmax - k) // 2
        wc = wc.at[:, :, off:off + k].add(w)
        bc = bc + b
    wconv_t = jnp.transpose(wc, (2, 1, 0)).reshape(kmax * Cin, D)   # (tap*cin, D)

    pe = _positional_encoding(T, D)                                  # (T, D), NOT B-tiled

    # --- decomposition: pre-sum over scales, pre-transpose, concat trend|seasonality ---
    wts = jnp.concatenate([jnp.sum(params["trend_w"], axis=0).T,
                           jnp.sum(params["season_w"], axis=0).T], axis=1)   # (D, 2D)
    bts = jnp.concatenate([jnp.sum(params["trend_b"], axis=0),
                           jnp.sum(params["season_b"], axis=0)])[None, :]

    # --- im2col of the input ("same" padding, width kmax), bf16 stream ---
    pad = kmax // 2
    xp = jnp.pad(x, ((0, 0), (pad, pad), (0, 0)))
    cols = jnp.stack([xp[:, o:o + T, :] for o in range(kmax)], axis=2)   # (B,T,kmax,Cin)
    xcol = cols.reshape(B, T, kmax * Cin).astype(jnp.bfloat16)
    # TODO(synk): an in-kernel halo conv would avoid the kmax x im2col HBM blow-up at large B*T.

    rb = _pick_time_block(T, row_block)
    h = fused_embed_decomp(xcol, pe, wconv_t.astype(jnp.bfloat16), bc[None, :],
                           wts.astype(jnp.bfloat16), bts, time_block=rb)   # (B,T,D) f32

    # --- single fused attention stack + output head ---
    nb = -(-T // block_size)
    T_pad = nb * block_size
    if T_pad != T:
        h = jnp.pad(h, ((0, 0), (0, T_pad - T), (0, 0)))
    h_blocks = h.reshape(B * nb, block_size, D)

    wqkv = jnp.stack([jnp.concatenate([l["wq"].T, l["wk"].T, l["wv"].T], axis=1)
                      for l in params["attn"]]).astype(jnp.bfloat16)       # (NL, D, 3D)
    bqkv = jnp.stack([jnp.concatenate([l["bq"], l["bk"], l["bv"]])[None, :]
                      for l in params["attn"]])                            # (NL, 1, 3D)
    wo = jnp.stack([l["wo"].T for l in params["attn"]]).astype(jnp.bfloat16)  # (NL, D, D)
    bo = jnp.stack([l["bo"][None, :] for l in params["attn"]])              # (NL, 1, D)

    # TODO(synk): Dropout in fc_out is treated as identity (inference mode); no RNG path.
    y = fused_block_attention_head(
        h_blocks, wqkv, bqkv, wo, bo,
        params["ln_g"][None, :], params["ln_b"][None, :],
        params["out_w"].T, params["out_b"][None, :],
        batch=B, num_blocks=nb, block_size=block_size, seq_len=T,
        num_heads=num_heads)
    return y.reshape(B, -1)


# ---------------------------------------------------------------------------
# Pure-JAX reference mirroring the PyTorch forward (f32, per-scale / per-layer).
# ---------------------------------------------------------------------------
def _reference_forward(x, params, *, num_heads, block_size):
    B, T, Cin = x.shape
    D = params["conv_w"][0].shape[0]
    hd = D // num_heads

    feats = jnp.zeros((B, T, D), jnp.float32)
    for w, b, k in zip(params["conv_w"], params["conv_b"], params["scales"]):
        pad = k // 2
        xp = jnp.pad(x, ((0, 0), (pad, pad), (0, 0)))
        acc = jnp.zeros((B, T, D), jnp.float32)
        for j in range(k):
            acc = acc + jnp.einsum("btc,dc->btd", xp[:, j:j + T, :], w[:, :, j])
        feats = feats + acc + b[None, None, :]

    h = feats + _positional_encoding(T, D)[None]
    nS = len(params["scales"])
    trend = sum(jnp.einsum("btd,od->bto", h, params["trend_w"][s]) + params["trend_b"][s]
                for s in range(nS))
    seas = sum(jnp.einsum("btd,od->bto", h, params["season_w"][s]) + params["season_b"][s]
               for s in range(nS))
    h = h + trend + seas

    for lyr in params["attn"]:
        blocks = []
        for start in range(0, T, block_size):
            xb = h[:, start:start + block_size, :]
            L = xb.shape[1]
            q = jnp.einsum("bld,od->blo", xb, lyr["wq"]) + lyr["bq"]
            k = jnp.einsum("bld,od->blo", xb, lyr["wk"]) + lyr["bk"]
            v = jnp.einsum("bld,od->blo", xb, lyr["wv"]) + lyr["bv"]
            q = q.reshape(B, L, num_heads, hd)
            k = k.reshape(B, L, num_heads, hd)
            v = v.reshape(B, L, num_heads, hd)
            s = jnp.einsum("blhe,bmhe->bhlm", q, k) / math.sqrt(hd)
            p = jax.nn.softmax(s, axis=-1)
            ctx = jnp.einsum("bhlm,bmhe->blhe", p, v).reshape(B, L, D)
            blocks.append(jnp.einsum("bld,od->blo", ctx, lyr["wo"]) + lyr["bo"])
        h = jnp.concatenate(blocks, axis=1)

    hl = h[:, -1, :]
    mu = hl.mean(-1, keepdims=True)
    var = ((hl - mu) ** 2).mean(-1, keepdims=True)
    hn = (hl - mu) / jnp.sqrt(var + 1e-5)
    y = hn * params["ln_g"] + params["ln_b"]
    return y @ params["out_w"].T + params["out_b"]


if __name__ == "__main__":
    # Small shapes consistent with the module defaults.
    B, T, Cin = 2, 8, 8           # batch, seq, input_dim
    D, H, NL, O = 32, 4, 2, 4     # model_dim, num_heads, num_layers, output_dim
    scales = [1, 3, 5]
    block_size = 10

    key = jax.random.PRNGKey(0)
    keys = iter(jax.random.split(key, 64))

    def u(k, shape, fan_in):
        bound = 1.0 / math.sqrt(fan_in)
        return jax.random.uniform(k, shape, jnp.float32, -bound, bound)

    x = jax.random.normal(next(keys), (B, T, Cin), dtype=jnp.float32)
    params = {
        "scales": scales,
        "conv_w": [u(next(keys), (D, Cin, k), Cin * k) for k in scales],
        "conv_b": [u(next(keys), (D,), Cin * k) for k in scales],
        "trend_w": u(next(keys), (len(scales), D, D), D),
        "trend_b": u(next(keys), (len(scales), D), D),
        "season_w": u(next(keys), (len(scales), D, D), D),
        "season_b": u(next(keys), (len(scales), D), D),
        "attn": [
            {"wq": u(next(keys), (D, D), D), "bq": u(next(keys), (D,), D),
             "wk": u(next(keys), (D, D), D), "bk": u(next(keys), (D,), D),
             "wv": u(next(keys), (D, D), D), "bv": u(next(keys), (D,), D),
             "wo": u(next(keys), (D, D), D), "bo": u(next(keys), (D,), D)}
            for _ in range(NL)
        ],
        "ln_g": jnp.ones((D,), jnp.float32),
        "ln_b": jnp.zeros((D,), jnp.float32),
        "out_w": u(next(keys), (O, D), D),
        "out_b": u(next(keys), (O,), D),
    }

    out = advanced_auto_informer_forward(x, params, num_heads=H, block_size=block_size)
    out = jax.block_until_ready(out)

    ref = _reference_forward(x, params, num_heads=H, block_size=block_size)
    assert out.shape == (B, O)
    # Precision contract: bf16 MXU operands (f32 accumulation, f32 softmax / LN /
    # residuals) through embed + attention; agreement with the all-f32 reference
    # is correspondingly loosened.
    assert jnp.allclose(out, ref, atol=1e-1, rtol=5e-2), (out, ref)

    print("KERNEL_OK")
</pallas_src>

<mosaic_0001>
module attributes {stable_mosaic.version = 11 : i64} {
  func.func @_embed_decomp_kernel(%arg0: i32, %arg1: i32, %arg2: memref<1x8x40xbf16, #tpu.memory_space<vmem>>, %arg3: memref<8x32xf32, #tpu.memory_space<vmem>>, %arg4: memref<40x32xbf16, #tpu.memory_space<vmem>>, %arg5: memref<1x32xf32, #tpu.memory_space<vmem>>, %arg6: memref<32x64xbf16, #tpu.memory_space<vmem>>, %arg7: memref<1x64xf32, #tpu.memory_space<vmem>>, %arg8: memref<1x8x32xf32, #tpu.memory_space<vmem>>) attributes {dimension_semantics = [#tpu.dimension_semantics<parallel>, #tpu.dimension_semantics<parallel>], iteration_bounds = array<i64: 2, 1>, scalar_prefetch = 0 : i64, scratch_operands = 0 : i64, tpu.core_type = #tpu.core_type<tc>, window_params = [{transform_indices = @transform_0, window_bounds = array<i64: 1, 8, 40>}, {transform_indices = @transform_1, window_bounds = array<i64: 8, 32>}, {pipeline_mode = #tpu.pipeline_mode<synchronous>, transform_indices = @transform_2, window_bounds = array<i64: 40, 32>}, {pipeline_mode = #tpu.pipeline_mode<synchronous>, transform_indices = @transform_3, window_bounds = array<i64: 1, 32>}, {pipeline_mode = #tpu.pipeline_mode<synchronous>, transform_indices = @transform_4, window_bounds = array<i64: 32, 64>}, {pipeline_mode = #tpu.pipeline_mode<synchronous>, transform_indices = @transform_5, window_bounds = array<i64: 1, 64>}, {transform_indices = @transform_6, window_bounds = array<i64: 1, 8, 32>}]} {
    %c0 = arith.constant 0 : index
    %c0_0 = arith.constant 0 : index
    %c0_1 = arith.constant 0 : index
    %0 = vector.load %arg2[%c0, %c0_0, %c0_1] : memref<1x8x40xbf16, #tpu.memory_space<vmem>>, vector<1x8x40xbf16>
    %1 = vector.shape_cast %0 : vector<1x8x40xbf16> to vector<8x40xbf16>
    %c0_2 = arith.constant 0 : index
    %c0_3 = arith.constant 0 : index
    %2 = vector.load %arg4[%c0_2, %c0_3] : memref<40x32xbf16, #tpu.memory_space<vmem>>, vector<40x32xbf16>
    %cst = arith.constant dense<0.000000e+00> : vector<8x32xf32>
    %3 = tpu.matmul %1, %2, %cst {dimension_numbers = #tpu.dot_dimension_numbers<[1], [0], [0], [1], [0, 0, 1, 1], [], []>} : vector<8x40xbf16>, vector<40x32xbf16>, vector<8x32xf32> -> vector<8x32xf32>
    %c0_4 = arith.constant 0 : index
    %c0_5 = arith.constant 0 : index
    %4 = vector.load %arg5[%c0_4, %c0_5] : memref<1x32xf32, #tpu.memory_space<vmem>>, vector<1x32xf32>
    %5 = vector.broadcast %4 : vector<1x32xf32> to vector<8x32xf32>
    %6 = arith.addf %3, %5 : vector<8x32xf32>
    %c0_6 = arith.constant 0 : index
    %c0_7 = arith.constant 0 : index
    %7 = vector.load %arg3[%c0_6, %c0_7] : memref<8x32xf32, #tpu.memory_space<vmem>>, vector<8x32xf32>
    %8 = arith.addf %6, %7 : vector<8x32xf32>
    %9 = arith.truncf %8 : vector<8x32xf32> to vector<8x32xbf16>
    %c0_8 = arith.constant 0 : index
    %c0_9 = arith.constant 0 : index
    %10 = vector.load %arg6[%c0_8, %c0_9] : memref<32x64xbf16, #tpu.memory_space<vmem>>, vector<32x64xbf16>
    %cst_10 = arith.constant dense<0.000000e+00> : vector<8x64xf32>
    %11 = tpu.matmul %9, %10, %cst_10 {dimension_numbers = #tpu.dot_dimension_numbers<[1], [0], [0], [1], [0, 0, 1, 1], [], []>} : vector<8x32xbf16>, vector<32x64xbf16>, vector<8x64xf32> -> vector<8x64xf32>
    %c0_11 = arith.constant 0 : index
    %c0_12 = arith.constant 0 : index
    %12 = vector.load %arg7[%c0_11, %c0_12] : memref<1x64xf32, #tpu.memory_space<vmem>>, vector<1x64xf32>
    %13 = vector.broadcast %12 : vector<1x64xf32> to vector<8x64xf32>
    %14 = arith.addf %11, %13 : vector<8x64xf32>
    %15 = vector.extract_strided_slice %14 {offsets = [0, 0], sizes = [8, 32], strides = [1, 1]} : vector<8x64xf32> to vector<8x32xf32>
    %16 = arith.addf %8, %15 : vector<8x32xf32>
    %17 = vector.extract_strided_slice %14 {offsets = [0, 32], sizes = [8, 32], strides = [1, 1]} : vector<8x64xf32> to vector<8x32xf32>
    %18 = arith.addf %16, %17 : vector<8x32xf32>
    %c0_13 = arith.constant 0 : index
    %c0_14 = arith.constant 0 : index
    %c0_15 = arith.constant 0 : index
    %19 = vector.load %arg8[%c0_13, %c0_14, %c0_15] : memref<1x8x32xf32, #tpu.memory_space<vmem>>, vector<1x8x32xf32>
    %20 = vector.shape_cast %19 : vector<1x8x32xf32> to vector<8x32xf32>
    %21 = vector.shape_cast %18 : vector<8x32xf32> to vector<1x8x32xf32>
    tpu.vector_store %arg8[%c0_13, %c0_14, %c0_15], %21 {strides = array<i32>} : memref<1x8x32xf32, #tpu.memory_space<vmem>>, vector<1x8x32xf32>,
    return
  }
  func.func @transform_0(%arg0: i32, %arg1: i32) -> (i32, i32, i32) {
    %c0_i32 = arith.constant 0 : i32
    %c0_i32_0 = arith.constant 0 : i32
    return %arg0, %arg1, %c0_i32 : i32, i32, i32
  }
  func.func @transform_1(%arg0: i32, %arg1: i32) -> (i32, i32) {
    %c0_i32 = arith.constant 0 : i32
    %c0_i32_0 = arith.constant 0 : i32
    return %arg1, %c0_i32 : i32, i32
  }
  func.func @transform_2(%arg0: i32, %arg1: i32) -> (i32, i32) {
    %c0_i32 = arith.constant 0 : i32
    %c0_i32_0 = arith.constant 0 : i32
    %c0_i32_1 = arith.constant 0 : i32
    return %c0_i32, %c0_i32_0 : i32, i32
  }
  func.func @transform_3(%arg0: i32, %arg1: i32) -> (i32, i32) {
    %c0_i32 = arith.constant 0 : i32
    %c0_i32_0 = arith.constant 0 : i32
    %c0_i32_1 = arith.constant 0 : i32
    return %c0_i32, %c0_i32_0 : i32, i32
  }
  func.func @transform_4(%arg0: i32, %arg1: i32) -> (i32, i32) {
    %c0_i32 = arith.constant 0 : i32
    %c0_i32_0 = arith.constant 0 : i32
    %c0_i32_1 = arith.constant 0 : i32
    return %c0_i32, %c0_i32_0 : i32, i32
  }
  func.func @transform_5(%arg0: i32, %arg1: i32) -> (i32, i32) {
    %c0_i32 = arith.constant 0 : i32
    %c0_i32_0 = arith.constant 0 : i32
    %c0_i32_1 = arith.constant 0 : i32
    return %c0_i32, %c0_i32_0 : i32, i32
  }
  func.func @transform_6(%arg0: i32, %arg1: i32) -> (i32, i32, i32) {
    %c0_i32 = arith.constant 0 : i32
    %c0_i32_0 = arith.constant 0 : i32
    return %arg0, %arg1, %c0_i32 : i32, i32, i32
  }
}

</mosaic_0001>

<llo_original>
// kernel: tpu_custom_call.1
$region0: #{tpu_custom_call.1}
  #allocation0 [shape = 'u32[]', space=smem, size = 0x4, offset = 0x4, fixed_abs, tag = 'smem constant byte address 0x4 - core index']
  #allocation1 [shape = 'u32[144,128]{1,0:T(1,128)}', space=vmem, size = 0x12000, scoped, tag = 'internal scratch']
  %s0 = inlined_call_operand.vmem [shape: bf16[2,8,40], index: 0, kind: input, shape index: {}]
  %s1 = inlined_call_operand.vmem [shape: f32[8,32], index: 1, kind: input, shape index: {}]
  %s2 = inlined_call_operand.vmem [shape: bf16[40,32], index: 2, kind: input, shape index: {}]
  %s3 = inlined_call_operand.vmem [shape: f32[1,32], index: 3, kind: input, shape index: {}]
  %s4 = inlined_call_operand.vmem [shape: bf16[32,64], index: 4, kind: input, shape index: {}]
  %s5 = inlined_call_operand.vmem [shape: f32[1,64], index: 5, kind: input, shape index: {}]
  %s6 = inlined_call_operand.hbm [shape: f32[2,8,32], index: 6, kind: output, shape index: {}]
  %s7 = sld [smem:[#allocation0]]
  $region57: #{tpu_custom_call.1} parent=0
    _
  %s9 = ssub.s32 1, %s7
  %s10 = scalar_select 0, %s9, %s7
  $region1: #{tpu_custom_call.1} parent=0
    #allocation2 [shape = 'u8[8192]{0}', space=vmem, size = 0x2000, scoped, tag = 'output window, operand 0']
    #allocation3 [shape = 's32[2]{0}', space=sflag, size = 0x8, scoped, tag = 'scoped memory for tpu_custom_call.1']
    %11 = vsyncpa [#allocation3], 0
    %s12 = scalar_lea.sflag [#allocation3], 1
    %13 = vsyncpa %s12, 0
    loop: start=0, step=1, limit=4
    $region2: #{tpu_custom_call.1} parent=1 // loop_pre_header
      _
    $region3: #{tpu_custom_call.1} parent=1 // loop_header
      %s15 = sphi 0, %s19
      %p16 = scmp.ge.s32.totalorder %s15, 4
      %s22 = sphi 0, %s34
      %s23 = sphi 0, %s30
      %s24 = sphi 0, %s22
      %s25 = sphi 0, %s23
      %s26 = sphi 0, %s24
      %s27 = sphi 0, %s25
      %s39 = sphi 0, %s41
      %s42 = sphi 0, %s39
      %s43 = sphi 0, %s42
      %s59 = sphi 0, %s43
      %s65 = sphi 0, %s67
      %s68 = sphi 0, %s65
      %s69 = sphi 0, %s68
      %s85 = sphi 0, %s69
      %s89 = sphi 0, %s89
      %s91 = sphi 0, %s89
      %s92 = sphi 0, %s91
      %s106 = sphi 0, %s92
      %s110 = sphi 0, %s110
      %s112 = sphi 0, %s110
      %s113 = sphi 0, %s112
      %s127 = sphi 0, %s113
      %s131 = sphi 0, %s131
      %s133 = sphi 0, %s131
      %s134 = sphi 0, %s133
      %s148 = sphi 0, %s134
      %s152 = sphi 0, %s152
      %s154 = sphi 0, %s152
      %s155 = sphi 0, %s154
      %s169 = sphi 0, %s155
      %s177 = sphi 0, %s179
      %s180 = sphi 0, %s177
      %s181 = sphi 0, %s180
      %s197 = sphi 0, %s181
    $region4: #{tpu_custom_call.1} parent=1 // loop_header_branch
      %18 = sbr.rel (%p16) target = $region8
    $region5: #{tpu_custom_call.1} parent=1 // loop_body
      %s20 = ssub.s32 %s15, 1
      %s21 = ssub.s32 %s15, 2
      %s28 = sadd.s32 1, %s23
      %p29 = scmp.ge.s32.totalorder %s28, 1
      %s30 = scalar_select %p29, 0, %s28
      %s31 = sadd.s32 1, %s22
      %s32 = scalar_select %p29, %s31, %s22
      %p33 = scmp.ge.s32.totalorder %s32, 2
      %s34 = scalar_select %p33, 0, %s32
      %s35 = ssub.s32 %s22, %s34
      %s36 = ssub.s32 %s23, %s30
      %s37 = sor.u32 %s35, %s36
      %p38 = scmp.eq.s32.totalorder %s37, 0
      %s40 = sadd.s32 %s39, 1
      %s41 = scalar_select %p38, %s39, %s40
      %p44 = pneg %p38
      %p45 = scmp.eq.s32.totalorder %s15, 1
      %p46 = por %p44, %p45
      %p47 = scmp.ne.s32.totalorder %s39, %s42
      %p48 = scmp.eq.s32.totalorder %s15, 0
      %p49 = por %p47, %p48
      %p50 = scmp.ne.s32.totalorder %s39, %s42
      %p51 = scmp.eq.s32.totalorder %s20, 1
      %p52 = por %p50, %p51
      %p53 = scmp.ne.s32.totalorder %s42, %s43
      %p54 = scmp.eq.s32.totalorder %s20, 0
      %p55 = por %p53, %p54
      %p56 = scmp.ne.s32.totalorder %s42, %s43
      %p57 = scmp.eq.s32.totalorder %s21, 1
      %p58 = por %p56, %p57
      %p60 = scmp.ne.s32.totalorder %s43, %s59
      %p61 = scmp.eq.s32.totalorder %s21, 0
      %p62 = por %p60, %p61
      %s63 = ssub.s32 %s23, %s30
      %p64 = scmp.eq.s32.totalorder %s63, 0
      %s66 = sadd.s32 %s65, 1
      %s67 = scalar_select %p64, %s65, %s66
      %p70 = pneg %p64
      %p71 = scmp.eq.s32.totalorder %s15, 1
      %p72 = por %p70, %p71
      %p73 = scmp.ne.s32.totalorder %s65, %s68
      %p74 = scmp.eq.s32.totalorder %s15, 0
      %p75 = por %p73, %p74
      %p76 = scmp.ne.s32.totalorder %s65, %s68
      %p77 = scmp.eq.s32.totalorder %s20, 1
      %p78 = por %p76, %p77
      %p79 = scmp.ne.s32.totalorder %s68, %s69
      %p80 = scmp.eq.s32.totalorder %s20, 0
      %p81 = por %p79, %p80
      %p82 = scmp.ne.s32.totalorder %s68, %s69
      %p83 = scmp.eq.s32.totalorder %s21, 1
      %p84 = por %p82, %p83
      %p86 = scmp.ne.s32.totalorder %s69, %s85
      %p87 = scmp.eq.s32.totalorder %s21, 0
      %p88 = por %p86, %p87
      %s90 = sadd.s32 %s89, 1
      %p93 = scmp.eq.s32.totalorder %s15, 1
      %p94 = scmp.ne.s32.totalorder %s89, %s91
      %p95 = scmp.eq.s32.totalorder %s15, 0
      %p96 = por %p94, %p95
      %p97 = scmp.ne.s32.totalorder %s89, %s91
      %p98 = scmp.eq.s32.totalorder %s20, 1
      %p99 = por %p97, %p98
      %p100 = scmp.ne.s32.totalorder %s91, %s92
      %p101 = scmp.eq.s32.totalorder %s20, 0
      %p102 = por %p100, %p101
      %p103 = scmp.ne.s32.totalorder %s91, %s92
      %p104 = scmp.eq.s32.totalorder %s21, 1
      %p105 = por %p103, %p104
      %p107 = scmp.ne.s32.totalorder %s92, %s106
      %p108 = scmp.eq.s32.totalorder %s21, 0
      %p109 = por %p107, %p108
      %s111 = sadd.s32 %s110, 1
      %p114 = scmp.eq.s32.totalorder %s15, 1
      %p115 = scmp.ne.s32.totalorder %s110, %s112
      %p116 = scmp.eq.s32.totalorder %s15, 0
      %p117 = por %p115, %p116
      %p118 = scmp.ne.s32.totalorder %s110, %s112
      %p119 = scmp.eq.s32.totalorder %s20, 1
      %p120 = por %p118, %p119
      %p121 = scmp.ne.s32.totalorder %s112, %s113
      %p122 = scmp.eq.s32.totalorder %s20, 0
      %p123 = por %p121, %p122
      %p124 = scmp.ne.s32.totalorder %s112, %s113
      %p125 = scmp.eq.s32.totalorder %s21, 1
      %p126 = por %p124, %p125
      %p128 = scmp.ne.s32.totalorder %s113, %s127
      %p129 = scmp.eq.s32.totalorder %s21, 0
      %p130 = por %p128, %p129
      %s132 = sadd.s32 %s131, 1
      %p135 = scmp.eq.s32.totalorder %s15, 1
      %p136 = scmp.ne.s32.totalorder %s131, %s133
      %p137 = scmp.eq.s32.totalorder %s15, 0
      %p138 = por %p136, %p137
      %p139 = scmp.ne.s32.totalorder %s131, %s133
      %p140 = scmp.eq.s32.totalorder %s20, 1
      %p141 = por %p139, %p140
      %p142 = scmp.ne.s32.totalorder %s133, %s134
      %p143 = scmp.eq.s32.totalorder %s20, 0
      %p144 = por %p142, %p143
      %p145 = scmp.ne.s32.totalorder %s133, %s134
      %p146 = scmp.eq.s32.totalorder %s21, 1
      %p147 = por %p145, %p146
      %p149 = scmp.ne.s32.totalorder %s134, %s148
      %p150 = scmp.eq.s32.totalorder %s21, 0
      %p151 = por %p149, %p150
      %s153 = sadd.s32 %s152, 1
      %p156 = scmp.eq.s32.totalorder %s15, 1
      %p157 = scmp.ne.s32.totalorder %s152, %s154
      %p158 = scmp.eq.s32.totalorder %s15, 0
      %p159 = por %p157, %p158
      %p160 = scmp.ne.s32.totalorder %s152, %s154
      %p161 = scmp.eq.s32.totalorder %s20, 1
      %p162 = por %p160, %p161
      %p163 = scmp.ne.s32.totalorder %s154, %s155
      %p164 = scmp.eq.s32.totalorder %s20, 0
      %p165 = por %p163, %p164
      %p166 = scmp.ne.s32.totalorder %s154, %s155
      %p167 = scmp.eq.s32.totalorder %s21, 1
      %p168 = por %p166, %p167
      %p170 = scmp.ne.s32.totalorder %s155, %s169
      %p171 = scmp.eq.s32.totalorder %s21, 0
      %p172 = por %p170, %p171
      %s173 = ssub.s32 %s22, %s34
      %s174 = ssub.s32 %s23, %s30
      %s175 = sor.u32 %s173, %s174
      %p176 = scmp.eq.s32.totalorder %s175, 0
      %s178 = sadd.s32 %s177, 1
      %s179 = scalar_select %p176, %s177, %s178
      %p182 = pneg %p176
      %p183 = scmp.eq.s32.totalorder %s15, 1
      %p184 = por %p182, %p183
      %p185 = scmp.ne.s32.totalorder %s177, %s180
      %p186 = scmp.eq.s32.totalorder %s15, 0
      %p187 = por %p185, %p186
      %p188 = scmp.ne.s32.totalorder %s177, %s180
      %p189 = scmp.eq.s32.totalorder %s20, 1
      %p190 = por %p188, %p189
      %p191 = scmp.ne.s32.totalorder %s180, %s181
      %p192 = scmp.eq.s32.totalorder %s20, 0
      %p193 = por %p191, %p192
      %p194 = scmp.ne.s32.totalorder %s180, %s181
      %p195 = scmp.eq.s32.totalorder %s21, 1
      %p196 = por %p194, %p195
      %p198 = scmp.ne.s32.totalorder %s181, %s197
      %p199 = scmp.eq.s32.totalorder %s21, 0
      %p200 = por %p198, %p199
      %p201 = scmp.le.s32.totalorder 1, %s15
      %p202 = scmp.lt.s32.totalorder %s15, 3
      %p203 = pnand %p201, %p202
      %p204 = pneg %p203
      // Predicated region
      $region9: #{tpu_custom_call.1} parent=5 // pred_check
        _
      $region10: #{tpu_custom_call.1} parent=5 // pred_check_branch
        %206 = sbr.rel (%p203) target = $region12
      $region11: #{tpu_custom_call.1} parent=5 // pred_region
        %s207 = ssub.s32 %s15, 1
        // Predicated region
        $region13: #{tpu_custom_call.1} parent=11 // pred_check
          %p208 = pneg %p81
        $region14: #{tpu_custom_call.1} parent=11 // pred_check_branch
          %210 = sbr.rel (%p208) target = $region16
        $region15: #{tpu_custom_call.1} parent=11 // pred_region
          %p211 = scmp.lt.s32.totalorder %s25, 0
          %s212 = scalar_select %p211, %s25, 0
          %s213 = smul.addr %s212, 8
          %s214 = scalar_lea.vmem %s1, %s213
        $region16: #{tpu_custom_call.1} parent=11 // pred_fallthru
          _
        // Predicated region
        $region17: #{tpu_custom_call.1} parent=11 // pred_check
          %p215 = pneg %p102
        $region18: #{tpu_custom_call.1} parent=11 // pred_check_branch
          %217 = sbr.rel (%p215) target = $region20
        $region19: #{tpu_custom_call.1} parent=11 // pred_region
          _
        $region20: #{tpu_custom_call.1} parent=11 // pred_fallthru
          _
        // Predicated region
        $region21: #{tpu_custom_call.1} parent=11 // pred_check
          %p218 = pneg %p123
        $region22: #{tpu_custom_call.1} parent=11 // pred_check_branch
          %220 = sbr.rel (%p218) target = $region24
        $region23: #{tpu_custom_call.1} parent=11 // pred_region
          _
        $region24: #{tpu_custom_call.1} parent=11 // pred_fallthru
          _
        // Predicated region
        $region25: #{tpu_custom_call.1} parent=11 // pred_check
          %p221 = pneg %p144
        $region26: #{tpu_custom_call.1} parent=11 // pred_check_branch
          %223 = sbr.rel (%p221) target = $region28
        $region27: #{tpu_custom_call.1} parent=11 // pred_region
          _
        $region28: #{tpu_custom_call.1} parent=11 // pred_fallthru
          _
        // Predicated region
        $region29: #{tpu_custom_call.1} parent=11 // pred_check
          %p224 = pneg %p165
        $region30: #{tpu_custom_call.1} parent=11 // pred_check_branch
          %226 = sbr.rel (%p224) target = $region32
        $region31: #{tpu_custom_call.1} parent=11 // pred_region
          _
        $region32: #{tpu_custom_call.1} parent=11 // pred_fallthru
          _
      $region12: #{tpu_custom_call.1} parent=5 // pred_fallthru
        _
      %p227 = scmp.lt.s32.totalorder %s15, 2
      // Predicated region
      $region33: #{tpu_custom_call.1} parent=5 // pred_check
        %p228 = pneg %p227
      $region34: #{tpu_custom_call.1} parent=5 // pred_check_branch
        %230 = sbr.rel (%p228) target = $region36
      $region35: #{tpu_custom_call.1} parent=5 // pred_region
        // Predicated region
        $region37: #{tpu_custom_call.1} parent=35 // pred_check
          %p231 = pneg %p49
        $region38: #{tpu_custom_call.1} parent=35 // pred_check_branch
          %233 = sbr.rel (%p231) target = $region40
        $region39: #{tpu_custom_call.1} parent=35 // pred_region
          %p234 = scmp.lt.s32.totalorder %s22, 1
          %s235 = scalar_select %p234, %s22, 1
          %p236 = scmp.lt.s32.totalorder %s23, 0
          %s237 = scalar_select %p236, %s23, 0
          %s238 = sadd.s32 %s237, %s235
          %s239 = smul.addr %s238, 4
          %s240 = scalar_lea.vmem %s0, %s239
        $region40: #{tpu_custom_call.1} parent=35 // pred_fallthru
          _
      $region36: #{tpu_custom_call.1} parent=5 // pred_fallthru
        _
      %p241 = scmp.le.s32.totalorder 1, %s15
      %p242 = scmp.lt.s32.totalorder %s15, 3
      %p243 = pnand %p241, %p242
      %p244 = pneg %p243
      // Predicated region
      $region41: #{tpu_custom_call.1} parent=5 // pred_check
        _
      $region42: #{tpu_custom_call.1} parent=5 // pred_check_branch
        %246 = sbr.rel (%p243) target = $region44
      $region43: #{tpu_custom_call.1} parent=5 // pred_region
        %s247 = ssub.s32 %s15, 1
        %p248 = scmp.lt.s32.totalorder %s24, 1
        %s249 = scalar_select %p248, %s24, 1
        %p250 = scmp.lt.s32.totalorder %s25, 0
        %s251 = scalar_select %p250, %s25, 0
        %s252 = sadd.s32 %s251, %s249
        %s253 = smul.addr %s252, 4
        %s254 = scalar_lea.vmem %s0, %s253
        %p255 = pneg %p55
        %p256 = pneg %p52
        %p257 = scmp.lt.s32.totalorder %s25, 0
        %s258 = scalar_select %p257, %s25, 0
        %s259 = smul.addr %s258, 8
        %s260 = scalar_lea.vmem %s1, %s259
        %p261 = pneg %p81
        %p262 = pneg %p78
        %p263 = pneg %p102
        %p264 = pneg %p99
        %p265 = pneg %p123
        %p266 = pneg %p120
        %p267 = pneg %p144
        %p268 = pneg %p141
        %p269 = pneg %p165
        %p270 = pneg %p162
        %p271 = pneg %p193
        %p272 = pneg %p190
        %s273 = sand.u32 %s180, 1
        %s274 = scalar_lea.sflag [#allocation3], %s273
        %s275 = sand.u32 %s180, 1
        %s276 = smul.addr %s275, 8
        %s277 = scalar_lea.vmem [#allocation2], %s276
        %p278 = scmp.lt.s32.totalorder %s24, 1
        %s279 = scalar_select %p278, %s24, 1
        %p280 = scmp.lt.s32.totalorder %s25, 0
        %s281 = scalar_select %p280, %s25, 0
        %s282 = sadd.s32 %s281, %s279
        %s283 = smul.addr %s282, 4
        %s284 = scalar_lea.vmem %s0, %s283
        %p285 = scmp.lt.s32.totalorder %s25, 0
        %s286 = scalar_select %p285, %s25, 0
        %s287 = smul.addr %s286, 8
        %s288 = scalar_lea.vmem %s1, %s287
        %v290 = vld [vmem:[%s284] sm:$0xf]
        %v291 = vld [vmem:[%s2] sm:$0xf]
        %v292 = vld [vmem:[%s2 + $0x4] sm:$0xf]
        %v293 = vld [vmem:[%s2 + $0x8] sm:$0xf]
        %v294 = vld [vmem:[%s2 + $0xc] sm:$0xf]
        %v295 = vld [vmem:[%s2 + $0x10] sm:$0xf]
        %v296 = vld [vmem:[%s3] sm:$0x1]
        %v298 = vlaneseq
        %v299 = vshrl.u32 %v298, 7
        %v300 = vsub.s32 0, %v299
        %v301 = vrot.slane %v296, %v300
        %v308 = vunpack.c.l.b16 %v291
        %v309 = vunpack.c.l.b16 %v292
        %v310 = vunpack.c.l.b16 %v293
        %v311 = vunpack.c.l.b16 %v294
        %v312 = vunpack.c.l.b16 %v295
        %v313 = vpack.c.b16 %v309, %v308
        %v314 = vpack.c.b16 %v311, %v310
        %v315 = vpack.c.b16 %v312, %v312
        %vm318 = vcmask 326656
        %v320 = vsel %vm318, %v290, 0
        %vm322 = vcmask 1043456
        %v324 = vsel %vm322, %v315, 0
        %326 = vmatprep.subr.bf16.mxu0 0
        %327 = vmatpush1.bf16.msra.mxu0 %v313
        %328 = vmatprep.subr.bf16.mxu0 0
        %329 = vmatpush1.bf16.msra.mxu0 %v314
        %330 = vmatprep.subr.bf16.mxu0 0
        %331 = vmatpush1.bf16.msra.mxu0 %v324
        %332 = vmatprep.subr.bf16.mxu0 0
        %333 = vmatpush1.bf16.msra.mxu0 0
        %334 = vmatprep.subr.bf16.mxu0 0
        %335 = vmatpush1.bf16.msra.mxu0 0
        %336 = vmatprep.subr.bf16.mxu0 0
        %337 = vmatpush1.bf16.msra.mxu0 0
        %338 = vmatprep.subr.bf16.mxu0 0
        %339 = vmatpush1.bf16.msra.mxu0 0
        %340 = vmatprep.subr.bf16.mxu0 0
        %341 = vmatpush1.bf16.msra.mxu0 0
        %342 = vmatprep.subr.bf16.mxu0 0
        %343 = vmatpush1.bf16.msra.mxu0 0
        %344 = vmatprep.subr.bf16.mxu0 0
        %345 = vmatpush1.bf16.msra.mxu0 0
        %346 = vmatprep.subr.bf16.mxu0 0
        %347 = vmatpush1.bf16.msra.mxu0 0
        %348 = vmatprep.subr.bf16.mxu0 0
        %349 = vmatpush1.bf16.msra.mxu0 0
        %350 = vmatprep.subr.bf16.mxu0 0
        %351 = vmatpush1.bf16.msra.mxu0 0
        %352 = vmatprep.subr.bf16.mxu0 0
        %353 = vmatpush1.bf16.msra.mxu0 0
        %354 = vmatprep.subr.bf16.mxu0 0
        %355 = vmatpush1.bf16.msra.mxu0 0
        %356 = vmatprep.subr.bf16.mxu0 0
        %357 = vmatpush1.bf16.msra.mxu0 0
        %358 = vmatprep.mubr.bf16.mxu0 0
        %359 = vmatmul.mubr.bf16.gmra.mrb[0].mxu0 %v320
        %v360 = vpop.f32.mrb[0].mxu0
        %v361 = vadd.f32 %v301, %v360
        %v362 = vpop.f32.mrb[0].mxu0
        %v363 = vpop.f32.mrb[0].mxu0
        %v364 = vpop.f32.mrb[0].mxu0
        %365 = vdwg.mxu0
        %v366 = vld [vmem:[%s288] sm:$0xff]
        %v367 = vadd.f32 %v361, %v366
        %v368 = vpack.c.bf16 %v367, %v367
        %v369 = vld [vmem:[%s4] sm:$0xf]
        %v370 = vld [vmem:[%s4 + $0x4] sm:$0xf]
        %v371 = vld [vmem:[%s4 + $0x8] sm:$0xf]
        %v372 = vld [vmem:[%s4 + $0xc] sm:$0xf]
        %v373 = vld [vmem:[%s5] sm:$0x1]
        %v375 = vlaneseq
        %v376 = vshrl.u32 %v375, 7
        %v377 = vsub.s32 0, %v376
        %v378 = vrot.slane %v373, %v377
        %v384 = vunpack.c.l.b16 %v369
        %v385 = vunpack.c.l.b16 %v370
        %v386 = vunpack.c.l.b16 %v371
        %v387 = vunpack.c.l.b16 %v372
        %v388 = vpack.c.b16 %v385, %v384
        %v389 = vpack.c.b16 %v387, %v386
        %vm392 = vcmask 261120
        %v394 = vsel %vm392, %v368, 0
        %396 = vmatprep.subr.bf16.mxu0 0
        %397 = vmatpush1.bf16.msra.mxu0 %v388
        %398 = vmatprep.subr.bf16.mxu0 0
        %399 = vmatpush1.bf16.msra.mxu0 %v389
        %400 = vmatprep.subr.bf16.mxu0 0
        %401 = vmatpush1.bf16.msra.mxu0 0
        %402 = vmatprep.subr.bf16.mxu0 0
        %403 = vmatpush1.bf16.msra.mxu0 0
        %404 = vmatprep.subr.bf16.mxu0 0
        %405 = vmatpush1.bf16.msra.mxu0 0
        %406 = vmatprep.subr.bf16.mxu0 0
        %407 = vmatpush1.bf16.msra.mxu0 0
        %408 = vmatprep.subr.bf16.mxu0 0
        %409 = vmatpush1.bf16.msra.mxu0 0
        %410 = vmatprep.subr.bf16.mxu0 0
        %411 = vmatpush1.bf16.msra.mxu0 0
        %412 = vmatprep.subr.bf16.mxu0 0
        %413 = vmatpush1.bf16.msra.mxu0 0
        %414 = vmatprep.subr.bf16.mxu0 0
        %415 = vmatpush1.bf16.msra.mxu0 0
        %416 = vmatprep.subr.bf16.mxu0 0
        %417 = vmatpush1.bf16.msra.mxu0 0
        %418 = vmatprep.subr.bf16.mxu0 0
        %419 = vmatpush1.bf16.msra.mxu0 0
        %420 = vmatprep.subr.bf16.mxu0 0
        %421 = vmatpush1.bf16.msra.mxu0 0
        %422 = vmatprep.subr.bf16.mxu0 0
        %423 = vmatpush1.bf16.msra.mxu0 0
        %424 = vmatprep.subr.bf16.mxu0 0
        %425 = vmatpush1.bf16.msra.mxu0 0
        %426 = vmatprep.subr.bf16.mxu0 0
        %427 = vmatpush1.bf16.msra.mxu0 0
        %428 = vmatprep.mubr.bf16.mxu0 0
        %429 = vmatmul.mubr.bf16.gmra.mrb[0].mxu0 %v394
        %v430 = vpop.f32.mrb[0].mxu0
        %v431 = vadd.f32 %v378, %v430
        %v432 = vpop.f32.mrb[0].mxu0
        %v433 = vpop.f32.mrb[0].mxu0
        %v434 = vpop.f32.mrb[0].mxu0
        %435 = vdwg.mxu0
        %v436 = vadd.f32 %v367, %v431
        %438 = vrot.lane.b32.xlu0 %v431, 96
        %v439 = vpop.permute.xlu0 %438
        %v441 = vadd.f32 %v436, %v439
        %442 = vst.msk [vmem:[%s277] sm:$0xff] %vm392, %v441
        %s443 = sand.u32 %s180, 1
        %s444 = scalar_lea.sflag [#allocation3], %s443
        %s445 = sand.u32 %s180, 1
        %s446 = smul.addr %s445, 8
        %s447 = scalar_lea.vmem [#allocation2], %s446
        // Predicated region
        $region45: #{tpu_custom_call.1} parent=43 // pred_check
          %p448 = pneg %p190
        $region46: #{tpu_custom_call.1} parent=43 // pred_check_branch
          %450 = sbr.rel (%p448) target = $region48
        $region47: #{tpu_custom_call.1} parent=43 // pred_region
          %s452 = ssub.s32 128, 128
          %453 = vsyncadd %s444, %s452
          %s454 = sadd.s32 %s25, %s24
          %s455 = smul.addr %s454, 128
          %s456 = scalar_lea.hbm %s6, %s455
          %s458 = sshll.u32 %s447, 4
          %s459 = int_to_ptr.vmem [resolvable:$true] %s458
          %461 = dma.vmem_to_hbm [thread:$0]  %s459, 128, %s456, %s444
        $region48: #{tpu_custom_call.1} parent=43 // pred_fallthru
          _
      $region44: #{tpu_custom_call.1} parent=5 // pred_fallthru
        _
      %p462 = scmp.le.s32.totalorder 2, %s15
      // Predicated region
      $region49: #{tpu_custom_call.1} parent=5 // pred_check
        %p463 = pneg %p462
      $region50: #{tpu_custom_call.1} parent=5 // pred_check_branch
        %465 = sbr.rel (%p463) target = $region52
      $region51: #{tpu_custom_call.1} parent=5 // pred_region
        %s466 = ssub.s32 %s15, 2
        // Predicated region
        $region53: #{tpu_custom_call.1} parent=51 // pred_check
          %p467 = pneg %p196
        $region54: #{tpu_custom_call.1} parent=51 // pred_check_branch
          %469 = sbr.rel (%p467) target = $region56
        $region55: #{tpu_custom_call.1} parent=51 // pred_region
          %s470 = sand.u32 %s181, 1
          %s471 = scalar_lea.sflag [#allocation3], %s470
          %s472 = sand.u32 %s181, 1
          %s473 = smul.addr %s472, 8
          %s474 = scalar_lea.vmem [#allocation2], %s473
          %475 = dma.done %s471, 128
        $region56: #{tpu_custom_call.1} parent=51 // pred_fallthru
          _
      $region52: #{tpu_custom_call.1} parent=5 // pred_fallthru
        _
    $region6: #{tpu_custom_call.1} parent=1 // loop_footer
      %s19 = sadd.s32 1, %s15
    $region7: #{tpu_custom_call.1} parent=1 // loop_footer_branch
      %14 = sbr.rel target = $region3
    $region8: #{tpu_custom_call.1} parent=1 // loop_exit
      _
    %476 = vsyncpa [#allocation3], 1
    %s477 = scalar_lea.sflag [#allocation3], 1
    %478 = vsyncpa %s477, 1

</llo_original>
